<compile_context>
chip_gen: v7x
topology: tpu7x:2x2x1
jax: 0.10.0
libtpu: 0.0.40
codegen_flags: <defaults>
</compile_context>

<pallas_src>
import functools

import jax
import jax.numpy as jnp
from jax.experimental import pallas as pl
from jax.experimental.pallas import tpu as pltpu


def _round_up(x, m):
    return (x + m - 1) // m * m


def _dfl_kernel(pred_ref, side_ref, loss_ref):
    """Lane-dense DFL tile.

    pred_ref: (R, TB)  reg_max bins on sublanes, rows on lanes.
    side_ref: (2, TB)  row 0 = target, row 1 = per-row weight.
    loss_ref: (1, TB)  per-row loss, lane-dense.
    """
    pred = pred_ref[...].astype(jnp.float32)           # (R, TB)
    t = side_ref[0:1, :].astype(jnp.float32)           # (1, TB)
    w = side_ref[1:2, :].astype(jnp.float32)           # (1, TB)

    # target.long() truncates toward zero; DFL targets are >= 0, so floor == trunc.
    left_f = jnp.floor(t)                               # (1, TB)
    lw = (left_f + 1.0) - t                             # left_weight  = right - t
    rw = t - left_f                                     # right_weight = t - left

    # Numerically-stable log-sum-exp over the bin axis (sublane reduce).
    m = jnp.max(pred, axis=0, keepdims=True)                               # (1, TB)
    lse = m + jnp.log(jnp.sum(jnp.exp(pred - m), axis=0, keepdims=True))   # (1, TB)

    # Fused one-hot gather: since lw + rw == 1,
    #   CE(left)*lw + CE(right)*rw == lse - (pred[left]*lw + pred[right]*rw).
    rows = jax.lax.broadcasted_iota(jnp.int32, pred.shape, 0)              # (R, TB)
    left_i = left_f.astype(jnp.int32)
    blend = (jnp.where(rows == left_i, lw, 0.0)
             + jnp.where(rows == left_i + 1, rw, 0.0))                     # (R, TB)
    picked = jnp.sum(pred * blend, axis=0, keepdims=True)                  # (1, TB)

    # NOTE: if t is exactly integral, the right bin (left+1) may lie outside
    # [0, reg_max); its contribution is masked here because rw == 0 (PyTorch
    # would raise an out-of-bounds index in that case).
    loss_ref[...] = (lse - picked) * w


@functools.partial(jax.jit, static_argnames=("reduction", "block_b"))
def distribution_focal_loss(pred_distribution, target, weights=None,
                            reduction="mean", block_b=1024):
    """JAX/Pallas equivalent of DistributionFocalLoss.forward.

    pred_distribution: (B, reg_max), any float dtype (kept native for the DMA).
    target:            (B,) or (B, 1) float bin coordinates.
    weights:           optional (B // 4,) per-group-of-4 weights.
    """
    B, R = pred_distribution.shape

    # Lane-dense tiling: rows live on the lane (last) axis, padded to 128.
    block_eff = min(block_b, _round_up(B, 128))
    B_pad = _round_up(B, block_eff)

    # Layout plumbing only (transpose + pad): bins on sublanes, rows on lanes.
    pred_t = jnp.pad(pred_distribution, ((0, B_pad - B), (0, 0))).T        # (R, B_pad)

    t_row = target.reshape(-1).astype(jnp.float32)
    if weights is not None:
        # PyTorch: loss.view(-1, 4) * weights.unsqueeze(-1) -> one weight per
        # consecutive group of 4 rows; expand to per-row in the wrapper (glue).
        w_row = jnp.repeat(weights.astype(jnp.float32), 4)
    else:
        w_row = jnp.ones((B,), jnp.float32)
    side = jnp.stack([t_row, w_row], axis=0)                               # (2, B)
    # Pad targets with 0.5 so padded rows hit valid bins (their loss is sliced off).
    side = jnp.pad(side, ((0, 0), (0, B_pad - B)), constant_values=0.5)

    grid = (B_pad // block_eff,)

    loss_rows = pl.pallas_call(
        _dfl_kernel,
        out_shape=jax.ShapeDtypeStruct((1, B_pad), jnp.float32),
        grid_spec=pltpu.PrefetchScalarGridSpec(
            num_scalar_prefetch=0,
            grid=grid,
            in_specs=[
                pl.BlockSpec((R, block_eff), lambda i: (0, i)),
                pl.BlockSpec((2, block_eff), lambda i: (0, i)),
            ],
            out_specs=pl.BlockSpec((1, block_eff), lambda i: (0, i)),
        ),
        compiler_params=pltpu.CompilerParams(
            dimension_semantics=("parallel",),   # independent tiles; no carried state
        ),
    )(pred_t, side)

    loss = loss_rows[0, :B]
    if reduction == "mean":
        return loss.mean()
    if reduction == "sum":
        return loss.sum()
    return loss


def _reference(pred, target, weights=None, reduction="mean"):
    """Pure-JAX reference mirroring the PyTorch forward (sanity check)."""
    pred = pred.astype(jnp.float32)
    t = target.reshape(-1).astype(jnp.float32)
    left = jnp.trunc(t).astype(jnp.int32)
    right = left + 1
    lw = right.astype(jnp.float32) - t
    rw = t - left.astype(jnp.float32)
    logp = jax.nn.log_softmax(pred, axis=-1)
    ce_l = -jnp.take_along_axis(logp, left[:, None], axis=-1)[:, 0]
    ce_r = -jnp.take_along_axis(logp, right[:, None], axis=-1)[:, 0]
    loss = ce_l * lw + ce_r * rw
    if weights is not None:
        loss = (loss.reshape(-1, 4) * weights[:, None]).reshape(-1)
    if reduction == "mean":
        return loss.mean()
    if reduction == "sum":
        return loss.sum()
    return loss


if __name__ == "__main__":
    B, REG_MAX = 32, 16   # small shapes consistent with (b, reg_max) / (b, 1)

    key = jax.random.PRNGKey(0)
    k_pred, k_tgt, k_w = jax.random.split(key, 3)

    pred = jax.random.normal(k_pred, (B, REG_MAX), dtype=jnp.float32)
    # target in [0, reg_max - 1) so the right bin is always valid, shape (B, 1)
    target = jax.random.uniform(k_tgt, (B, 1), minval=0.0,
                                maxval=float(REG_MAX - 1) - 1e-3,
                                dtype=jnp.float32)
    weights = jax.random.uniform(k_w, (B // 4,), minval=0.5, maxval=1.5,
                                 dtype=jnp.float32)

    out_mean = distribution_focal_loss(pred, target, weights, reduction="mean")
    out_sum = distribution_focal_loss(pred, target, None, reduction="sum")
    out_none = distribution_focal_loss(pred, target, None, reduction="none")
    jax.block_until_ready((out_mean, out_sum, out_none))

    ref_mean = _reference(pred, target, weights, "mean")
    ref_sum = _reference(pred, target, None, "sum")
    ref_none = _reference(pred, target, None, "none")

    assert jnp.allclose(out_mean, ref_mean, rtol=1e-5, atol=1e-5)
    assert jnp.allclose(out_sum, ref_sum, rtol=1e-5, atol=1e-5)
    assert jnp.allclose(out_none, ref_none, rtol=1e-5, atol=1e-5)

    print("KERNEL_OK")
</pallas_src>

<mosaic_0001>
module attributes {stable_mosaic.version = 11 : i64} {
  func.func @_dfl_kernel(%arg0: i32, %arg1: memref<16x128xf32, #tpu.memory_space<vmem>>, %arg2: memref<2x128xf32, #tpu.memory_space<vmem>>, %arg3: memref<1x128xf32, #tpu.memory_space<vmem>>) attributes {dimension_semantics = [#tpu.dimension_semantics<parallel>], iteration_bounds = array<i64: 1>, scalar_prefetch = 0 : i64, scratch_operands = 0 : i64, tpu.core_type = #tpu.core_type<tc>, window_params = [{transform_indices = @transform_0, window_bounds = array<i64: 16, 128>}, {transform_indices = @transform_1, window_bounds = array<i64: 2, 128>}, {transform_indices = @transform_2, window_bounds = array<i64: 1, 128>}]} {
    %c0 = arith.constant 0 : index
    %c0_0 = arith.constant 0 : index
    %0 = vector.load %arg1[%c0, %c0_0] : memref<16x128xf32, #tpu.memory_space<vmem>>, vector<16x128xf32>
    %c0_1 = arith.constant 0 : index
    %c0_2 = arith.constant 0 : index
    %1 = vector.load %arg2[%c0_1, %c0_2] : memref<2x128xf32, #tpu.memory_space<vmem>>, vector<1x128xf32>
    %c1 = arith.constant 1 : index
    %c0_3 = arith.constant 0 : index
    %2 = vector.load %arg2[%c1, %c0_3] : memref<2x128xf32, #tpu.memory_space<vmem>>, vector<1x128xf32>
    %3 = math.floor %1 : vector<1x128xf32>
    %cst = arith.constant 1.000000e+00 : f32
    %4 = vector.broadcast %cst : f32 to vector<1x128xf32>
    %5 = arith.addf %3, %4 : vector<1x128xf32>
    %6 = arith.subf %5, %1 : vector<1x128xf32>
    %7 = arith.subf %1, %3 : vector<1x128xf32>
    %cst_4 = arith.constant dense<0xFF800000> : vector<128xf32>
    %8 = vector.multi_reduction <maximumf>, %0, %cst_4 [0] : vector<16x128xf32> to vector<128xf32>
    %9 = vector.shape_cast %8 : vector<128xf32> to vector<1x128xf32>
    %10 = vector.broadcast %9 : vector<1x128xf32> to vector<16x128xf32>
    %11 = arith.subf %0, %10 : vector<16x128xf32>
    %12 = math.exp %11 : vector<16x128xf32>
    %cst_5 = arith.constant dense<0.000000e+00> : vector<128xf32>
    %13 = vector.multi_reduction <add>, %12, %cst_5 [0] : vector<16x128xf32> to vector<128xf32>
    %14 = vector.shape_cast %13 : vector<128xf32> to vector<1x128xf32>
    %15 = math.log %14 : vector<1x128xf32>
    %16 = arith.addf %9, %15 : vector<1x128xf32>
    %17 = tpu.iota {dimensions = array<i32: 0>} : vector<16x128xi32>
    %18 = arith.fptosi %3 : vector<1x128xf32> to vector<1x128xi32>
    %19 = vector.broadcast %18 : vector<1x128xi32> to vector<16x128xi32>
    %20 = arith.cmpi eq, %17, %19 : vector<16x128xi32>
    %cst_6 = arith.constant 0.000000e+00 : f32
    %21 = vector.shape_cast %6 : vector<1x128xf32> to vector<1x128xf32>
    %22 = vector.broadcast %21 : vector<1x128xf32> to vector<16x128xf32>
    %23 = vector.broadcast %cst_6 : f32 to vector<16x128xf32>
    %24 = arith.select %20, %22, %23 : vector<16x128xi1>, vector<16x128xf32>
    %c1_i32 = arith.constant 1 : i32
    %25 = vector.broadcast %c1_i32 : i32 to vector<1x128xi32>
    %26 = arith.addi %18, %25 : vector<1x128xi32>
    %27 = vector.broadcast %26 : vector<1x128xi32> to vector<16x128xi32>
    %28 = arith.cmpi eq, %17, %27 : vector<16x128xi32>
    %cst_7 = arith.constant 0.000000e+00 : f32
    %29 = vector.shape_cast %7 : vector<1x128xf32> to vector<1x128xf32>
    %30 = vector.broadcast %29 : vector<1x128xf32> to vector<16x128xf32>
    %31 = vector.broadcast %cst_7 : f32 to vector<16x128xf32>
    %32 = arith.select %28, %30, %31 : vector<16x128xi1>, vector<16x128xf32>
    %33 = arith.addf %24, %32 : vector<16x128xf32>
    %34 = arith.mulf %0, %33 : vector<16x128xf32>
    %cst_8 = arith.constant dense<0.000000e+00> : vector<128xf32>
    %35 = vector.multi_reduction <add>, %34, %cst_8 [0] : vector<16x128xf32> to vector<128xf32>
    %36 = vector.shape_cast %35 : vector<128xf32> to vector<1x128xf32>
    %37 = arith.subf %16, %36 : vector<1x128xf32>
    %38 = arith.mulf %37, %2 : vector<1x128xf32>
    %c0_9 = arith.constant 0 : index
    %c0_10 = arith.constant 0 : index
    %39 = vector.load %arg3[%c0_9, %c0_10] : memref<1x128xf32, #tpu.memory_space<vmem>>, vector<1x128xf32>
    tpu.vector_store %arg3[%c0_9, %c0_10], %38 {strides = array<i32>} : memref<1x128xf32, #tpu.memory_space<vmem>>, vector<1x128xf32>,
    return
  }
  func.func @transform_0(%arg0: i32) -> (i32, i32) {
    %c0_i32 = arith.constant 0 : i32
    %c0_i32_0 = arith.constant 0 : i32
    return %c0_i32, %arg0 : i32, i32
  }
  func.func @transform_1(%arg0: i32) -> (i32, i32) {
    %c0_i32 = arith.constant 0 : i32
    %c0_i32_0 = arith.constant 0 : i32
    return %c0_i32, %arg0 : i32, i32
  }
  func.func @transform_2(%arg0: i32) -> (i32, i32) {
    %c0_i32 = arith.constant 0 : i32
    %c0_i32_0 = arith.constant 0 : i32
    return %c0_i32, %arg0 : i32, i32
  }
}

</mosaic_0001>

<llo_original>
// kernel: distribution_focal_loss.1
$region0: #{distribution_focal_loss.1}
  #allocation0 [shape = 'u32[]', space=smem, size = 0x4, offset = 0x4, fixed_abs, tag = 'smem constant byte address 0x4 - core index']
  #allocation1 [shape = 'u32[144,128]{1,0:T(1,128)}', space=vmem, size = 0x12000, scoped, tag = 'internal scratch']
  %s0 = inlined_call_operand.vmem [shape: f32[16,128], index: 0, kind: input, shape index: {}]
  %s1 = inlined_call_operand.vmem [shape: f32[2,128], index: 1, kind: input, shape index: {}]
  %s2 = inlined_call_operand.vmem [shape: f32[1,128], index: 2, kind: output, shape index: {}]
  %s3 = sld [smem:[#allocation0]]
  $region18: #{distribution_focal_loss.1} parent=0
    _
  %s5 = ssub.s32 1, %s3
  %s6 = scalar_select 0, %s5, %s3
  // Predicated region
  $region2: #{distribution_focal_loss.1} parent=0 // pred_check
    _
  $region3: #{distribution_focal_loss.1} parent=0 // pred_check_branch
    %8 = sbr.rel (0) target = $region5
  $region4: #{distribution_focal_loss.1} parent=0 // pred_region
    _
  $region5: #{distribution_focal_loss.1} parent=0 // pred_fallthru
    _
  // Predicated region
  $region6: #{distribution_focal_loss.1} parent=0 // pred_check
    _
  $region7: #{distribution_focal_loss.1} parent=0 // pred_check_branch
    %10 = sbr.rel (0) target = $region9
  $region8: #{distribution_focal_loss.1} parent=0 // pred_region
    _
  $region9: #{distribution_focal_loss.1} parent=0 // pred_fallthru
    _
  %v11 = vld [vmem:[%s0] sm:$0xff]
  %v12 = vld [vmem:[%s0 + $0x8] sm:$0xff]
  %v13 = vld [vmem:[%s1] sm:$0x1]
  %v14 = vld [vmem:[%s1 + $0x1] sm:$0x1]
  %v15 = vfloor.f32 %v13
  %v16 = vadd.f32 %v15, 1.0
  %v17 = vsub.f32 %v16, %v13
  %v18 = vsub.f32 %v13, %v15
  %v19 = vmax.f32 %v11, %v12
  %v20 = vrot.slane %v19, 4
  %v21 = vmax.f32 %v19, %v20
  %v22 = vrot.slane %v21, 2
  %v23 = vmax.f32 %v21, %v22
  %v24 = vrot.slane %v23, 1
  %v25 = vmax.f32 %v23, %v24
  %v26 = vsub.f32 %v11, %v25
  %v27 = vsub.f32 %v12, %v25
  %v28 = vmul.f32 %v26, 1.442695
  %v29 = vpow.pop %v28
  %v30 = vmul.f32 %v27, 1.442695
  %v31 = vpow.pop %v30
  %v32 = vadd.f32 %v29, %v31
  %v33 = vrot.slane %v32, 4
  %v34 = vadd.f32 %v32, %v33
  %v35 = vrot.slane %v34, 2
  %v36 = vadd.f32 %v34, %v35
  %v37 = vrot.slane %v36, 1
  %v38 = vadd.f32 %v36, %v37
  %v39 = vlog2.pop %v38
  %v40 = vmul.f32 %v39, 0.6931472
  %v41 = vadd.f32 %v25, %v40
  %v42 = vlaneseq
  %v43 = vshrl.u32 %v42, 7
  %v44 = vadd.s32 %v43, 8
  %v45 = vcvt.f32.s32.to.zero.pseudo %v15
  %v46 = vlaneseq
  %v47 = vshrl.u32 %v46, 7
  %v48 = vsub.s32 0, %v47
  %v49 = vrot.slane %v45, %v48
  %vm50 = vcmp.eq.s32.totalorder %v43, %v49
  %vm51 = vcmp.eq.s32.totalorder %v44, %v49
  %v52 = vlaneseq
  %v53 = vshrl.u32 %v52, 7
  %v54 = vsub.s32 0, %v53
  %v55 = vrot.slane %v17, %v54
  %v56 = vsel %vm50, %v55, 0.0
  %v57 = vsel %vm51, %v55, 0.0
  %v58 = vadd.s32 %v45, 1
  %v59 = vlaneseq
  %v60 = vshrl.u32 %v59, 7
  %v61 = vsub.s32 0, %v60
  %v62 = vrot.slane %v58, %v61
  %vm63 = vcmp.eq.s32.totalorder %v43, %v62
  %vm64 = vcmp.eq.s32.totalorder %v44, %v62
  %v65 = vlaneseq
  %v66 = vshrl.u32 %v65, 7
  %v67 = vsub.s32 0, %v66
  %v68 = vrot.slane %v18, %v67
  %v69 = vsel %vm63, %v68, 0.0
  %v70 = vsel %vm64, %v68, 0.0
  %v71 = vadd.f32 %v56, %v69
  %v72 = vadd.f32 %v57, %v70
  %v73 = vmul.f32 %v11, %v71
  %v74 = vmul.f32 %v12, %v72
  %v75 = vadd.f32 %v73, %v74
  %v76 = vrot.slane %v75, 4
  %v77 = vadd.f32 %v75, %v76
  %v78 = vrot.slane %v77, 2
  %v79 = vadd.f32 %v77, %v78
  %v80 = vrot.slane %v79, 1
  %v81 = vadd.f32 %v79, %v80
  %v82 = vsub.f32 %v41, %v81
  %v83 = vmul.f32 %v82, %v14
  %84 = vst [vmem:[%s2] sm:$0x1] %v83
  // Predicated region
  $region10: #{distribution_focal_loss.1} parent=0 // pred_check
    _
  $region11: #{distribution_focal_loss.1} parent=0 // pred_check_branch
    %86 = sbr.rel (0) target = $region13
  $region12: #{distribution_focal_loss.1} parent=0 // pred_region
    _
  $region13: #{distribution_focal_loss.1} parent=0 // pred_fallthru
    _
  // Predicated region
  $region14: #{distribution_focal_loss.1} parent=0 // pred_check
    _
  $region15: #{distribution_focal_loss.1} parent=0 // pred_check_branch
    %88 = sbr.rel (0) target = $region17
  $region16: #{distribution_focal_loss.1} parent=0 // pred_region
    _
  $region17: #{distribution_focal_loss.1} parent=0 // pred_fallthru
    _

</llo_original>
